<compile_context>
chip_gen: v5e
topology: v5e:2x2
jax: 0.10.0
libtpu: 0.0.40
codegen_flags: <defaults>
</compile_context>

<pallas_src>
import jax
import jax.numpy as jnp
from jax.experimental import pallas as pl
from jax.experimental.pallas import tpu as pltpu

_LANE = 128


def _round_up(v: int, m: int) -> int:
    return ((v + m - 1) // m) * m


def _sublane_pack(*dtypes) -> int:
    """Rows per sublane group: 8 for 32-bit, 16 for 16-bit, 32 for 8-bit."""
    min_itemsize = min(jnp.dtype(d).itemsize for d in dtypes)
    return max(8, 32 // max(min_itemsize, 1))


def _vmem_budget_bytes() -> int:
    """Per-generation budget for the pipelined working set (leaves headroom)."""
    cap = None
    try:
        info = pltpu.get_tpu_info()
        cap = getattr(info, "vmem_capacity_bytes", None)
    except Exception:
        cap = None
    if not cap:
        cap = 64 * 2**20  # conservative fallback: v7x per-TensorCore VMEM
    return int(cap * 0.6)


def _pick_tile(dim: int, cap: int, align: int):
    """Return (tile, padded_dim).

    Prefers (a) a single block covering the whole dim (allowed even when
    unaligned) or (b) an aligned tile that divides `dim` exactly, so that no
    operand copy (jnp.pad) is needed. Padding is the last resort.
    """
    if dim <= cap:
        return dim, dim
    c = (cap // align) * align
    while c >= align:
        if dim % c == 0:
            return c, dim
        c -= align
    c = (cap // align) * align
    return c, _round_up(dim, c)


# ----------------------------- kernels --------------------------------------
def _matmul_kernel_f32(x_ref, w_ref, o_ref):
    # The output block is resident across the K (last, "arbitrary") grid axis;
    # accumulate directly into it in f32 — no scratch, no epilogue copy.
    part = jnp.dot(x_ref[...], w_ref[...], preferred_element_type=jnp.float32)

    @pl.when(pl.program_id(2) == 0)
    def _init():
        o_ref[...] = part

    @pl.when(pl.program_id(2) != 0)
    def _acc():
        o_ref[...] += part


def _matmul_kernel_acc(x_ref, w_ref, o_ref, acc_ref):
    # Narrow output dtype: keep an f32 VMEM accumulator, cast once at the end.
    @pl.when(pl.program_id(2) == 0)
    def _init():
        acc_ref[...] = jnp.zeros_like(acc_ref)

    acc_ref[...] += jnp.dot(x_ref[...], w_ref[...],
                            preferred_element_type=jnp.float32)

    @pl.when(pl.program_id(2) == pl.num_programs(2) - 1)
    def _finalize():
        o_ref[...] = acc_ref[...].astype(o_ref.dtype)


def _single_block_kernel(x_ref, w_ref, o_ref):
    o_ref[...] = jnp.dot(x_ref[...], w_ref[...],
                         preferred_element_type=jnp.float32).astype(o_ref.dtype)


# ----------------------------- wrapper --------------------------------------
def ignored_module_forward(x: jax.Array, weight: jax.Array, *,
                           single_block_max_bytes: int = 4 << 20) -> jax.Array:
    """Pallas equivalent of IgnoredModule.forward: x @ weight."""
    M, K = x.shape
    K2, N = weight.shape
    assert K == K2, "inner dims must match"
    out_dtype = jnp.result_type(x.dtype, weight.dtype)
    isz_x = jnp.dtype(x.dtype).itemsize
    isz_w = jnp.dtype(weight.dtype).itemsize
    isz_o = jnp.dtype(out_dtype).itemsize

    # ---- tiny problems: one block, no K grid, no padding, no scratch ----
    total_bytes = M * K * isz_x + K * N * isz_w + M * N * isz_o
    if total_bytes <= single_block_max_bytes:
        return pl.pallas_call(
            _single_block_kernel,
            out_shape=jax.ShapeDtypeStruct((M, N), out_dtype),
        )(x, weight)

    # ---- tile caps, biased toward whichever operand dominates HBM traffic ----
    x_bytes = M * K * isz_x
    w_bytes = K * N * isz_w
    if w_bytes >= 4 * x_bytes:
        tm_cap, tn_cap = 1024, 256      # weight-dominant: sweep weight fewer times
    elif x_bytes >= 4 * w_bytes:
        tm_cap, tn_cap = 256, 1024      # activation-dominant: sweep x fewer times
    else:
        tm_cap, tn_cap = 512, 512
    tk_cap = 1024

    m_align = _sublane_pack(x.dtype, out_dtype)
    tm, M_pad = _pick_tile(M, tm_cap, m_align)
    tn, N_pad = _pick_tile(N, tn_cap, _LANE)
    tk, K_pad = _pick_tile(K, tk_cap, _LANE)

    use_scratch = jnp.dtype(out_dtype) != jnp.dtype(jnp.float32)
    budget = _vmem_budget_bytes()

    def footprint(tm_, tn_, tk_):
        f = 2 * (tm_ * tk_ * isz_x + tk_ * tn_ * isz_w + tm_ * tn_ * isz_o)
        if use_scratch:
            f += tm_ * tn_ * 4
        return f

    # Defensive: with the caps above the footprint is ~12 MiB worst case (f32),
    # well under any generation's budget, but keep a cheap safety valve.
    while footprint(tm, tn, tk) > budget and tk > _LANE:
        tk = max(_LANE, (tk // 2 // _LANE) * _LANE)
        K_pad = _round_up(K, tk)

    # v7x has 2 TensorCores sharing the grid via "parallel" axes: make sure at
    # least one parallel axis has >= 2 tiles when that is cheaply possible.
    if (M_pad // tm) * (N_pad // tn) == 1:
        if tn >= 2 * _LANE and tn % (2 * _LANE) == 0:
            tn //= 2
        elif tm >= 2 * m_align and tm % (2 * m_align) == 0:
            tm //= 2

    # Pad only the dims / operands that actually need it (zero pad is exact).
    pad_m, pad_k, pad_n = M_pad - M, K_pad - K, N_pad - N
    x_p = x if (pad_m == 0 and pad_k == 0) else jnp.pad(
        x, ((0, pad_m), (0, pad_k)))
    w_p = weight if (pad_k == 0 and pad_n == 0) else jnp.pad(
        weight, ((0, pad_k), (0, pad_n)))

    grid = (M_pad // tm, N_pad // tn, K_pad // tk)

    fp = footprint(tm, tn, tk)
    vmem_limit = int(min(budget, max(fp + (4 << 20), 16 << 20)))

    kernel = _matmul_kernel_acc if use_scratch else _matmul_kernel_f32
    scratch = [pltpu.VMEM((tm, tn), jnp.float32)] if use_scratch else []

    out_padded = pl.pallas_call(
        kernel,
        out_shape=jax.ShapeDtypeStruct((M_pad, N_pad), out_dtype),
        grid_spec=pltpu.PrefetchScalarGridSpec(
            num_scalar_prefetch=0,
            grid=grid,
            in_specs=[
                pl.BlockSpec((tm, tk), lambda i, j, k: (i, k)),
                pl.BlockSpec((tk, tn), lambda i, j, k: (k, j)),
            ],
            out_specs=pl.BlockSpec((tm, tn), lambda i, j, k: (i, j)),
            scratch_shapes=scratch,
        ),
        compiler_params=pltpu.CompilerParams(
            dimension_semantics=("parallel", "parallel", "arbitrary"),
            vmem_limit_bytes=vmem_limit,
        ),
    )(x_p, w_p)

    if pad_m or pad_n:
        out_padded = out_padded[:M, :N]
    return out_padded


if __name__ == "__main__":
    key = jax.random.PRNGKey(0)
    kx, kw, kx2, kw2 = jax.random.split(key, 4)

    # IgnoredModule(in_dim=32, out_dim=64): weight ~ randn((in_dim, out_dim)).
    in_dim, out_dim, batch = 32, 64, 8
    x = jax.random.normal(kx, (batch, in_dim), dtype=jnp.float32)
    weight = jax.random.normal(kw, (in_dim, out_dim), dtype=jnp.float32)

    out = ignored_module_forward(x, weight)
    jax.block_until_ready(out)
    ref = x @ weight
    assert out.shape == (batch, out_dim)
    assert jnp.allclose(out, ref, atol=1e-5, rtol=1e-5)

    # Also exercise the tiled / K-accumulating path (still a small problem).
    x2 = jax.random.normal(kx2, (128, 256), dtype=jnp.float32)
    w2 = jax.random.normal(kw2, (256, 384), dtype=jnp.float32)
    out2 = ignored_module_forward(x2, w2, single_block_max_bytes=0)
    jax.block_until_ready(out2)
    ref2 = x2 @ w2
    assert out2.shape == (128, 384)
    assert jnp.allclose(out2, ref2, atol=1e-2, rtol=1e-2)

    print("KERNEL_OK")
</pallas_src>

<mosaic_0001>
module attributes {stable_mosaic.version = 11 : i64} {
  func.func @_single_block_kernel(%arg0: memref<8x32xf32, #tpu.memory_space<vmem>>, %arg1: memref<32x64xf32, #tpu.memory_space<vmem>>, %arg2: memref<8x64xf32, #tpu.memory_space<vmem>>) attributes {dimension_semantics = [], scalar_prefetch = 0 : i64, scratch_operands = 0 : i64, tpu.core_type = #tpu.core_type<tc>} {
    %c0 = arith.constant 0 : index
    %c0_0 = arith.constant 0 : index
    %0 = vector.load %arg0[%c0, %c0_0] : memref<8x32xf32, #tpu.memory_space<vmem>>, vector<8x32xf32>
    %c0_1 = arith.constant 0 : index
    %c0_2 = arith.constant 0 : index
    %1 = vector.load %arg1[%c0_1, %c0_2] : memref<32x64xf32, #tpu.memory_space<vmem>>, vector<32x64xf32>
    %cst = arith.constant dense<0.000000e+00> : vector<8x64xf32>
    %2 = tpu.matmul %0, %1, %cst {dimension_numbers = #tpu.dot_dimension_numbers<[1], [0], [0], [1], [0, 0, 1, 1], [], []>} : vector<8x32xf32>, vector<32x64xf32>, vector<8x64xf32> -> vector<8x64xf32>
    %c0_3 = arith.constant 0 : index
    %c0_4 = arith.constant 0 : index
    %3 = vector.load %arg2[%c0_3, %c0_4] : memref<8x64xf32, #tpu.memory_space<vmem>>, vector<8x64xf32>
    tpu.vector_store %arg2[%c0_3, %c0_4], %2 {strides = array<i32>} : memref<8x64xf32, #tpu.memory_space<vmem>>, vector<8x64xf32>,
    return
  }
}

</mosaic_0001>

<llo_original>
// kernel: tpu_custom_call.1
$region0: #{tpu_custom_call.1}
  #allocation0 [shape = 'u32[]', space=smem, size = 0x4, offset = 0x4, fixed_abs, tag = 'smem constant byte address 0x4 - core index']
  #allocation1 [shape = 'u32[72,128]{1,0:T(1,128)}', space=vmem, size = 0x9000, scoped, tag = 'internal scratch']
  %s0 = inlined_call_operand.hbm [shape: f32[8,32], index: 0, kind: input, shape index: {}]
  %s1 = inlined_call_operand.hbm [shape: f32[32,64], index: 1, kind: input, shape index: {}]
  %s2 = inlined_call_operand.hbm [shape: f32[8,64], index: 2, kind: output, shape index: {}]
  %s3 = sld [smem:[#allocation0]]
  $region26: #{tpu_custom_call.1} parent=0
    _
  %s5 = ssub.s32 1, %s3
  %s6 = scalar_select 0, %s5, %s3
  $region1: #{tpu_custom_call.1} parent=0
    #allocation2 [shape = 'u8[4096]{0}', space=vmem, size = 0x1000, scoped, tag = 'input window, operand 0, single buffered']
    #allocation3 [shape = 's32[1]{0}', space=sflag, size = 0x4, scoped, tag = 'scoped memory for tpu_custom_call.1']
    #allocation4 [shape = 's32[1]{0}', space=sflag, size = 0x4, scoped, tag = 'scoped memory for tpu_custom_call.1']
    #allocation5 [shape = 'u8[16384]{0}', space=vmem, size = 0x4000, scoped, tag = 'input window, operand 1, single buffered']
    #allocation6 [shape = 's32[1]{0}', space=sflag, size = 0x4, scoped, tag = 'scoped memory for tpu_custom_call.1']
    #allocation7 [shape = 'u8[4096]{0}', space=vmem, size = 0x1000, scoped, tag = 'output window, operand 0, single buffered']
    %7 = vsyncpa [#allocation3], 0
    %8 = vsyncpa [#allocation6], 0
    %9 = vsyncpa [#allocation4], 0
    // Predicated region
    $region2: #{tpu_custom_call.1} parent=1 // pred_check
      _
    $region3: #{tpu_custom_call.1} parent=1 // pred_check_branch
      %11 = sbr.rel (0) target = $region5
    $region4: #{tpu_custom_call.1} parent=1 // pred_region
      %13 = vsyncadd [#allocation3], 0
      %s15 = sshll.u32 %s0, 4
      %s16 = int_to_ptr.hbm [resolvable:$true] %s15
      %s17 = sshll.u32 [#allocation2], 4
      %s18 = int_to_ptr.vmem [resolvable:$true] %s17
      %20 = dma.hbm_to_vmem [thread:$0]  %s16, 128, %s18, [#allocation3]
    $region5: #{tpu_custom_call.1} parent=1 // pred_fallthru
      _
    // Predicated region
    $region6: #{tpu_custom_call.1} parent=1 // pred_check
      _
    $region7: #{tpu_custom_call.1} parent=1 // pred_check_branch
      %22 = sbr.rel (0) target = $region9
    $region8: #{tpu_custom_call.1} parent=1 // pred_region
      %24 = vsyncadd [#allocation6], 0
      %s25 = sshll.u32 %s1, 4
      %s26 = int_to_ptr.hbm [resolvable:$true] %s25
      %s27 = sshll.u32 [#allocation5], 4
      %s28 = int_to_ptr.vmem [resolvable:$true] %s27
      %33 = dma.hbm_to_vmem [thread:$0]  %s26, 512, %s28, [#allocation6], 128, 128, 8
    $region9: #{tpu_custom_call.1} parent=1 // pred_fallthru
      _
    // Predicated region
    $region10: #{tpu_custom_call.1} parent=1 // pred_check
      _
    $region11: #{tpu_custom_call.1} parent=1 // pred_check_branch
      %35 = sbr.rel (0) target = $region13
    $region12: #{tpu_custom_call.1} parent=1 // pred_region
      %37 = dma.done [#allocation3], 128
    $region13: #{tpu_custom_call.1} parent=1 // pred_fallthru
      _
    // Predicated region
    $region14: #{tpu_custom_call.1} parent=1 // pred_check
      _
    $region15: #{tpu_custom_call.1} parent=1 // pred_check_branch
      %39 = sbr.rel (0) target = $region17
    $region16: #{tpu_custom_call.1} parent=1 // pred_region
      %41 = dma.done [#allocation6], 512
    $region17: #{tpu_custom_call.1} parent=1 // pred_fallthru
      _
    %v42 = vld [vmem:[#allocation2] sm:$0xff]
    %v43 = vld [vmem:[#allocation5] sm:$0xff]
    %v44 = vld [vmem:[#allocation5 + $0x8] sm:$0xff]
    %v45 = vld [vmem:[#allocation5 + $0x10] sm:$0xff]
    %v46 = vld [vmem:[#allocation5 + $0x18] sm:$0xff]
    %vm47 = vcmask 261120
    %v49 = vsel %vm47, %v42, 0
    %51 = vmatpush.msra.mxu0 0.0
    %52 = vmatpush.msra.mxu0 0.0
    %53 = vmatpush.msra.mxu0 0.0
    %54 = vmatpush.msra.mxu0 0.0
    %55 = vmatpush.msra.mxu0 0.0
    %56 = vmatpush.msra.mxu0 0.0
    %57 = vmatpush.msra.mxu0 0.0
    %58 = vmatpush.msra.mxu0 0.0
    %59 = vmatpush.msra.mxu0 0.0
    %60 = vmatpush.msra.mxu0 0.0
    %61 = vmatpush.msra.mxu0 0.0
    %62 = vmatpush.msra.mxu0 0.0
    %63 = vmatpush.msra.mxu0 %v46
    %64 = vmatpush.msra.mxu0 %v45
    %65 = vmatpush.msra.mxu0 %v44
    %66 = vmatpush.msra.mxu0 %v43
    %67 = vmatmul.f32.gmra.mxu0 %v49
    %v68 = vpop.f32.mrf.mxu0
    %v69 = vadd.f32 0.0, %v68
    %70 = vdwg.mxu0
    %vm71 = vcmask 523264
    %72 = vst.msk [vmem:[#allocation7] sm:$0xff] %vm71, %v69
    // Predicated region
    $region18: #{tpu_custom_call.1} parent=1 // pred_check
      _
    $region19: #{tpu_custom_call.1} parent=1 // pred_check_branch
      %74 = sbr.rel (0) target = $region21
    $region20: #{tpu_custom_call.1} parent=1 // pred_region
      %76 = vsyncadd [#allocation4], 0
      %s78 = sshll.u32 [#allocation7], 4
      %s79 = int_to_ptr.vmem [resolvable:$true] %s78
      %s80 = sshll.u32 %s2, 4
      %s81 = int_to_ptr.hbm [resolvable:$true] %s80
      %83 = dma.vmem_to_hbm [thread:$0]  %s79, 128, %s81, [#allocation4]
    $region21: #{tpu_custom_call.1} parent=1 // pred_fallthru
      _
    // Predicated region
    $region22: #{tpu_custom_call.1} parent=1 // pred_check
      _
    $region23: #{tpu_custom_call.1} parent=1 // pred_check_branch
      %85 = sbr.rel (0) target = $region25
    $region24: #{tpu_custom_call.1} parent=1 // pred_region
      %87 = dma.done [#allocation4], 128
    $region25: #{tpu_custom_call.1} parent=1 // pred_fallthru
      _
    %88 = vsyncpa [#allocation3], 1
    %89 = vsyncpa [#allocation6], 1
    %90 = vsyncpa [#allocation4], 1

</llo_original>
